<compile_context>
chip_gen: v7x
topology: tpu7x:2x2x1
jax: 0.10.0
libtpu: 0.0.40
codegen_flags: <defaults>
</compile_context>

<pallas_src>
import functools

import jax
import jax.numpy as jnp
import numpy as np
from jax import lax
from jax.experimental import pallas as pl
from jax.experimental.pallas import tpu as pltpu

RUN_FULL_REFERENCE = False          # full pure-JAX reference check (slow); unit checks run instead
_VMEM_LIMIT = 64 * 1024 * 1024      # == v7x per-core physical VMEM; well under v5e/v6e's 128 MiB


def _round_up(x, m):
    return ((x + m - 1) // m) * m


# ----------------------------------------------------------------------------
# Pallas kernels
# ----------------------------------------------------------------------------
def _conv_img_kernel(x_ref, w_ref, b_ref, o_ref):
    """Whole-image 3x3 VALID conv + bias + ReLU (small layers, one grid step per image).

    x_ref: (H, S_in, C) bf16, w_ref: (3, 3, C, tn) bf16, b_ref: (1, tn) f32,
    o_ref: (OH, OW, tn).  dy and dx are in-kernel; a fori_loop walks output rows so
    temporaries stay ~1 MiB.
    """
    oh_count, ow, tn = o_ref.shape
    bias = b_ref[...]

    def row_body(r, carry):
        acc = jnp.zeros((ow, tn), jnp.float32)
        for dy in range(3):
            row = x_ref[r + dy]                       # (S_in, C): dynamic major-axis index
            for dx in range(3):
                acc = acc + jnp.dot(row[dx:dx + ow, :], w_ref[dy, dx],
                                    preferred_element_type=jnp.float32)
        o_ref[r] = jnp.maximum(acc + bias, 0.0).astype(o_ref.dtype)
        return carry

    lax.fori_loop(0, oh_count, row_body, 0)


def _conv_row_kernel(x_ref, w_ref, b_ref, o_ref, acc_ref):
    """One output row, one dy tap (grid axis 2) of a 3x3 VALID conv (big layers).

    dx is handled in-kernel by three statically shifted slices of the full-width input row,
    so the A operand is only DMAed once per (row, cout-tile, dy) instead of once per tap.
    f32 accumulate across dy; fused bias + ReLU on the last dy.
    """
    ow = o_ref.shape[0]
    t = pl.program_id(2)

    @pl.when(t == 0)
    def _():
        acc_ref[...] = jnp.zeros_like(acc_ref)

    psum = jnp.dot(x_ref[pl.ds(0, ow), :], w_ref[0], preferred_element_type=jnp.float32)
    psum = psum + jnp.dot(x_ref[pl.ds(1, ow), :], w_ref[1], preferred_element_type=jnp.float32)
    psum = psum + jnp.dot(x_ref[pl.ds(2, ow), :], w_ref[2], preferred_element_type=jnp.float32)
    acc_ref[...] += psum

    @pl.when(t == pl.num_programs(2) - 1)
    def _():
        o_ref[...] = jnp.maximum(acc_ref[...] + b_ref[...], 0.0).astype(o_ref.dtype)


def _finalize_matmul(acc, bias_ref, o_ref, activation):
    out = acc + bias_ref[...]                           # (tm, tn) + (tm, 1)
    if activation == "relu":
        out = jnp.maximum(out, 0.0)
    elif activation == "softmax":                       # row-wise softmax (exact divide)
        m = jnp.max(out, axis=-1, keepdims=True)
        e = jnp.exp(out - m)
        out = e / jnp.sum(e, axis=-1, keepdims=True)
    o_ref[...] = out.astype(o_ref.dtype)


def _matmul_bias_kernel(a_ref, b_ref, bias_ref, o_ref, *scratch, activation, single_k):
    """Tiled (tm,tk)@(tk,tn) matmul with per-row bias; optional fused ReLU / softmax.

    When the K grid has a single step (single_k) the f32 accumulator scratch is skipped and
    the result is written straight from the dot (saves a (tm,tn) f32 VMEM round trip).
    """
    if single_k:
        acc = jnp.dot(a_ref[...], b_ref[...], preferred_element_type=jnp.float32)
        _finalize_matmul(acc, bias_ref, o_ref, activation)
        return

    acc_ref, = scratch
    k = pl.program_id(2)

    @pl.when(k == 0)
    def _():
        acc_ref[...] = jnp.zeros_like(acc_ref)

    acc_ref[...] += jnp.dot(a_ref[...], b_ref[...], preferred_element_type=jnp.float32)

    @pl.when(k == pl.num_programs(2) - 1)
    def _():
        _finalize_matmul(acc_ref[...], bias_ref, o_ref, activation)


# ----------------------------------------------------------------------------
# Pallas wrappers
# ----------------------------------------------------------------------------
def conv3x3_relu_image(x, w, b, out_w, *, out_dtype=jnp.bfloat16):
    """Whole-image conv for small layers. x: (N,H,S_in,Cp); w: (3,3,Cp,Cout); b: (1,Cout)."""
    N, H, S_in, Cp = x.shape
    Cout = w.shape[-1]
    OH = H - 2
    assert OH >= 1 and out_w % 8 == 0 and out_w + 2 <= S_in
    tn = Cout
    return pl.pallas_call(
        _conv_img_kernel,
        out_shape=jax.ShapeDtypeStruct((N, OH, out_w, Cout), out_dtype),
        grid=(N, Cout // tn),
        in_specs=[
            pl.BlockSpec((None, H, S_in, Cp), lambda n, j: (n, 0, 0, 0)),
            pl.BlockSpec((3, 3, Cp, tn), lambda n, j: (0, 0, 0, j)),
            pl.BlockSpec((1, tn), lambda n, j: (0, j)),
        ],
        out_specs=pl.BlockSpec((None, OH, out_w, tn), lambda n, j: (n, 0, 0, j)),
        compiler_params=pltpu.CompilerParams(
            dimension_semantics=("parallel", "parallel"),
            vmem_limit_bytes=_VMEM_LIMIT),
    )(x, w, b)


def _pick_row_tn(S_in, Cp, out_w, Cout, budget=40 * 1024 * 1024):
    """Largest Cout tile whose per-step VMEM footprint (buffers + acc + temps) fits budget."""
    if Cout <= 128 or Cout % 128 != 0:
        return Cout
    best = 128
    for tn in (128, 256, 512, 1024):
        if Cout % tn != 0:
            continue
        est = (2 * S_in * Cp * 2            # double-buffered input row
               + 2 * 3 * Cp * tn * 2        # double-buffered weight taps
               + 2 * out_w * tn * 2         # double-buffered output row
               + out_w * tn * 4             # f32 accumulator scratch
               + out_w * Cp * 2             # dx-shifted operand copy
               + out_w * tn * 4)            # dot-result temporary
        if est <= budget:
            best = tn
    return best


def conv3x3_relu_rows(x, w, b, out_w, *, out_dtype=jnp.bfloat16):
    """Per-output-row conv for big layers. x: (N,H,S_in,Cp); w: (3,3,Cp,Cout); b: (1,Cout)."""
    N, H, S_in, Cp = x.shape
    Cout = w.shape[-1]
    OH = H - 2
    assert OH >= 1 and out_w % 8 == 0 and out_w + 2 <= S_in
    tn = _pick_row_tn(S_in, Cp, out_w, Cout)
    xr = x.reshape(N * H, S_in, Cp)

    def a_map(r, j, t):
        n = r // OH
        oh = r % OH
        return (n * H + oh + t, 0, 0)          # input row = output row + dy

    y = pl.pallas_call(
        _conv_row_kernel,
        out_shape=jax.ShapeDtypeStruct((N * OH, out_w, Cout), out_dtype),
        grid=(N * OH, Cout // tn, 3),          # rows, cout tiles (parallel), dy (reduction)
        in_specs=[
            pl.BlockSpec((None, S_in, Cp), a_map),
            pl.BlockSpec((None, 3, Cp, tn), lambda r, j, t: (t, 0, 0, j)),
            pl.BlockSpec((1, tn), lambda r, j, t: (0, j)),
        ],
        out_specs=pl.BlockSpec((None, out_w, tn), lambda r, j, t: (r, 0, j)),
        scratch_shapes=[pltpu.VMEM((out_w, tn), jnp.float32)],
        compiler_params=pltpu.CompilerParams(
            dimension_semantics=("parallel", "parallel", "arbitrary"),
            vmem_limit_bytes=_VMEM_LIMIT),
    )(xr, w, b)
    return y.reshape(N, OH, out_w, Cout)


def conv3x3_relu(x, w, b, out_w, *, out_dtype=jnp.bfloat16):
    """Dispatch: whole-image kernel when the whole layer fits comfortably in VMEM."""
    N, H, S_in, Cp = x.shape
    Cout = w.shape[-1]
    OH = H - 2
    img_bytes = (2 * H * S_in * Cp * 2 + 2 * OH * out_w * Cout * 2
                 + 2 * 9 * Cp * Cout * 2 + out_w * Cout * 8 + S_in * Cp * 2)
    if img_bytes <= 24 * 1024 * 1024:
        return conv3x3_relu_image(x, w, b, out_w, out_dtype=out_dtype)
    return conv3x3_relu_rows(x, w, b, out_w, out_dtype=out_dtype)


def matmul_rowbias(wmat, xcols, bias, *, activation="none", softmax_group=None,
                   out_dtype=jnp.float32):
    """act(wmat @ xcols + bias): wmat (M,K) bf16, xcols (K,Nc) bf16, bias (M,1) f32.

    activation: "none" | "relu" | "softmax".  For "softmax", softmax_group gives the column
    group width (must tile Nc exactly); softmax is applied row-wise within each group.
    """
    M, K = wmat.shape
    K2, Nc = xcols.shape
    assert K == K2 and bias.shape == (M, 1)
    tm = 512 if M >= 512 else _round_up(M, 8)
    tk = min(2048, _round_up(K, 128))
    if activation == "softmax":
        assert softmax_group is not None and Nc % softmax_group == 0
        tn = softmax_group
        assert tn % 128 == 0 or tn == Nc
    else:
        tn = min(2048, _round_up(Nc, 128))
    Mp, Kp, Np = _round_up(M, tm), _round_up(K, tk), _round_up(Nc, tn)
    if activation == "softmax":
        assert Np == Nc, "softmax groups must not be column-padded"
    a = wmat if (Mp, Kp) == (M, K) else jnp.pad(wmat, ((0, Mp - M), (0, Kp - K)))
    bm = xcols if (Kp, Np) == (K, Nc) else jnp.pad(xcols, ((0, Kp - K), (0, Np - Nc)))
    bz = bias if Mp == M else jnp.pad(bias, ((0, Mp - M), (0, 0)))
    grid = (Mp // tm, Np // tn, Kp // tk)
    single_k = (Kp == tk)
    kernel = functools.partial(_matmul_bias_kernel, activation=activation, single_k=single_k)
    scratch = [] if single_k else [pltpu.VMEM((tm, tn), jnp.float32)]

    out = pl.pallas_call(
        kernel,
        out_shape=jax.ShapeDtypeStruct((Mp, Np), out_dtype),
        grid=grid,
        in_specs=[
            pl.BlockSpec((tm, tk), lambda i, j, k: (i, k)),
            pl.BlockSpec((tk, tn), lambda i, j, k: (k, j)),
            pl.BlockSpec((tm, 1), lambda i, j, k: (i, 0)),
        ],
        out_specs=pl.BlockSpec((tm, tn), lambda i, j, k: (i, j)),
        scratch_shapes=scratch,
        compiler_params=pltpu.CompilerParams(
            dimension_semantics=("parallel", "parallel", "arbitrary"),
            vmem_limit_bytes=_VMEM_LIMIT),
    )(a, bm, bz)
    if (Mp, Np) != (M, Nc):
        out = out[:M, :Nc]
    return out


# ----------------------------------------------------------------------------
# VGGNet
# ----------------------------------------------------------------------------
NR_CHANNELS = 3                                        # DatasetParams.nr_channels
_CONV_CH = [NR_CHANNELS, 16, 32, 64, 128, 256, 512, 1024, 2048]
_FC1_IN, _FC1_OUT, _FC2_OUT = 2048, 1500, 1000
_FC1_OUT_PAD, _FC2_OUT_PAD = 1536, 1024                # tile-aligned (multiples of 512)


def _plan_widths(W, n_layers=8):
    """Backward-minimal stored activation widths (multiples of 16, bf16 sublane tile).

    Every layer L writes exactly S[L] columns using input columns [0, S[L]+2) of the
    previous layer's S[L-1]-wide output, so nothing is ever left uninitialized.  Columns
    beyond the true VALID width carry ReLU(bias)-style values that provably never feed a
    valid output (each output column only reads the 3 input columns directly under it).
    """
    assert W - 2 * n_layers >= 1
    S = [0] * (n_layers + 1)
    S[n_layers] = _round_up(W - 2 * n_layers, 16)
    for L in range(n_layers - 1, 0, -1):
        S[L] = max(_round_up(W - 2 * L, 16), _round_up(S[L + 1] + 2, 16))
    S[0] = max(_round_up(W, 16), _round_up(S[1] + 2, 16))
    return S


def init_params(key):
    """PyTorch-default-like init, stored once in kernel-friendly layouts:
    conv weights (3, 3, Cin_pad, Cout) tap-major bf16; fc weights kept in torch (out, in)
    layout (exactly the A operand) pre-padded to tile-aligned shapes; biases f32."""
    params = {}
    keys = jax.random.split(key, 2 * 8 + 4)
    idx = 0
    for li in range(1, 9):
        cin, cout = _CONV_CH[li - 1], _CONV_CH[li]
        bound = 1.0 / float(np.sqrt(cin * 9))
        w = jax.random.uniform(keys[idx], (cout, cin, 3, 3), jnp.float32, -bound, bound)
        idx += 1
        b = jax.random.uniform(keys[idx], (cout,), jnp.float32, -bound, bound)
        idx += 1
        wt = jnp.transpose(w, (2, 3, 1, 0))            # (dy, dx, Cin, Cout)
        cin_p = _round_up(cin, 8)
        if cin_p != cin:
            wt = jnp.pad(wt, ((0, 0), (0, 0), (0, cin_p - cin), (0, 0)))
        params[f"conv{li}_w"] = wt.astype(jnp.bfloat16)
        params[f"conv{li}_b"] = b.reshape(1, cout)
    # fc1 (2048 -> 1500), rows pre-padded to 1536 (zero rows -> ReLU(0)=0 passthrough).
    bound = 1.0 / float(np.sqrt(_FC1_IN))
    w1 = jax.random.uniform(keys[idx], (_FC1_OUT, _FC1_IN), jnp.float32, -bound, bound)
    idx += 1
    b1 = jax.random.uniform(keys[idx], (_FC1_OUT,), jnp.float32, -bound, bound)
    idx += 1
    params["fc1_w"] = jnp.pad(w1, ((0, _FC1_OUT_PAD - _FC1_OUT), (0, 0))).astype(jnp.bfloat16)
    params["fc1_b"] = jnp.pad(b1, (0, _FC1_OUT_PAD - _FC1_OUT)).reshape(-1, 1)
    # final (1500 -> 1000): rows padded to 1024, K padded to 1536 (zeros kill the pad rows).
    bound = 1.0 / float(np.sqrt(_FC1_OUT))
    w2 = jax.random.uniform(keys[idx], (_FC2_OUT, _FC1_OUT), jnp.float32, -bound, bound)
    idx += 1
    b2 = jax.random.uniform(keys[idx], (_FC2_OUT,), jnp.float32, -bound, bound)
    idx += 1
    params["final_w"] = jnp.pad(
        w2, ((0, _FC2_OUT_PAD - _FC2_OUT), (0, _FC1_OUT_PAD - _FC1_OUT))).astype(jnp.bfloat16)
    params["final_b"] = jnp.pad(b2, (0, _FC2_OUT_PAD - _FC2_OUT)).reshape(-1, 1)
    return params


def vggnet_forward(params, x):
    """x: (N, C, H, W) NCHW f32 (PyTorch interface). Returns (N, 2048, H-16, 1000)."""
    N, C, H, W = x.shape
    S = _plan_widths(W, 8)
    # NCHW -> NHWC once, bf16 activations; pad channels to 8 and width to S[0] (zeros).
    xh = jnp.transpose(x, (0, 2, 3, 1)).astype(jnp.bfloat16)
    cp = _round_up(C, 8)
    xh = jnp.pad(xh, ((0, 0), (0, 0), (0, S[0] - W), (0, cp - C)))
    for li in range(1, 9):
        xh = conv3x3_relu(xh, params[f"conv{li}_w"], params[f"conv{li}_b"], S[li])

    Nb, OH8, S8, C8 = xh.shape
    true_w = W - 2 * 8
    assert true_w == _FC1_IN, "fc1 (in_features=2048) requires the last spatial dim == 2048"
    y = xh if S8 == true_w else xh[:, :, :true_w, :]
    # fc1 / final act on the LAST axis of the 4-D NCHW tensor (the module has no flatten),
    # i.e. on the spatial width here; the 2048 conv channels ride along as extra columns.
    ycols = jnp.transpose(y.reshape(Nb * OH8, true_w, C8), (1, 0, 2)).reshape(
        true_w, Nb * OH8 * C8)
    h1 = matmul_rowbias(params["fc1_w"], ycols, params["fc1_b"],
                        activation="relu", out_dtype=jnp.bfloat16)       # (1536, N*OH*C8)
    # F.softmax with no dim on a 4-D tensor -> dim=1 (the 2048 conv channels) == each
    # contiguous C8-wide group of columns; fused into the final matmul's finalize.
    h2 = matmul_rowbias(params["final_w"], h1, params["final_b"],
                        activation="softmax", softmax_group=C8,
                        out_dtype=jnp.float32)                            # (1024, N*OH*C8)
    h2 = h2[:_FC2_OUT]
    out = h2.reshape(_FC2_OUT, Nb, OH8, C8).transpose(1, 3, 2, 0)         # (N, 2048, OH, 1000)
    return out


def reference_forward(params, x):
    """Pure-JAX reference on the same bf16 weights (slow; only run when enabled)."""
    h = x
    cin = NR_CHANNELS
    for li in range(1, 9):
        w = params[f"conv{li}_w"].astype(jnp.float32)[:, :, :cin, :]
        cout = w.shape[-1]
        wk = jnp.transpose(w, (3, 2, 0, 1))
        h = lax.conv_general_dilated(h, wk, (1, 1), "VALID",
                                     dimension_numbers=("NCHW", "OIHW", "NCHW"))
        h = jax.nn.relu(h + params[f"conv{li}_b"].reshape(1, cout, 1, 1))
        cin = cout
    w1 = params["fc1_w"].astype(jnp.float32)[:_FC1_OUT, :]
    b1 = params["fc1_b"][:_FC1_OUT, 0]
    h = jax.nn.relu(jnp.einsum("nchw,ow->ncho", h, w1) + b1)
    w2 = params["final_w"].astype(jnp.float32)[:_FC2_OUT, :_FC1_OUT]
    b2 = params["final_b"][:_FC2_OUT, 0]
    h = jnp.einsum("ncho,po->nchp", h, w2) + b2
    return jax.nn.softmax(h, axis=1)


# ----------------------------------------------------------------------------
if __name__ == "__main__":
    key = jax.random.PRNGKey(0)
    pkey, xkey, tkey = jax.random.split(key, 3)
    k1, k2, k3, k4, k5, k6, k7, k8 = jax.random.split(tkey, 8)

    # --- unit check: both conv kernels vs lax.conv on a small shape ---
    Ht, S_in_t, Cp_t, Cout_t, out_w_t = 6, 48, 8, 16, 32
    xt = jax.random.normal(k1, (1, Ht, S_in_t, Cp_t), jnp.float32).astype(jnp.bfloat16)
    wt = (jax.random.normal(k2, (3, 3, Cp_t, Cout_t), jnp.float32) * 0.2).astype(jnp.bfloat16)
    bt = jax.random.normal(k3, (1, Cout_t), jnp.float32) * 0.2
    xf = xt.astype(jnp.float32)
    wf = jnp.transpose(wt.astype(jnp.float32), (3, 2, 0, 1))          # (Cout, Cin, 3, 3)
    ref_c = lax.conv_general_dilated(jnp.transpose(xf, (0, 3, 1, 2)), wf, (1, 1), "VALID",
                                     dimension_numbers=("NCHW", "OIHW", "NCHW"),
                                     precision=lax.Precision.HIGHEST)
    ref_c = jnp.maximum(ref_c + bt.reshape(1, Cout_t, 1, 1), 0.0)
    ref_c = np.asarray(jnp.transpose(ref_c, (0, 2, 3, 1)))[:, :, :out_w_t, :]
    for conv_fn in (conv3x3_relu_image, conv3x3_relu_rows):
        yt = conv_fn(xt, wt, bt, out_w_t, out_dtype=jnp.float32)
        yt = np.asarray(jax.block_until_ready(yt))
        np.testing.assert_allclose(yt, ref_c, rtol=2e-2, atol=2e-2)

    # --- unit check: matmul kernel (multi-K relu path, and fused-softmax single-K path) ---
    wm = (jax.random.normal(k4, (16, 2304), jnp.float32) * 0.05).astype(jnp.bfloat16)
    xm = jax.random.normal(k5, (2304, 256), jnp.float32).astype(jnp.bfloat16)
    bm = jax.random.normal(k6, (16, 1), jnp.float32) * 0.2
    om = np.asarray(jax.block_until_ready(
        matmul_rowbias(wm, xm, bm, activation="relu", out_dtype=jnp.float32)))
    refm = np.maximum(np.asarray(wm, np.float32) @ np.asarray(xm, np.float32)
                      + np.asarray(bm), 0.0)
    np.testing.assert_allclose(om, refm, rtol=2e-2, atol=2e-2)

    ws = (jax.random.normal(k7, (24, 40), jnp.float32) * 0.3).astype(jnp.bfloat16)
    xs = jax.random.normal(k8, (40, 256), jnp.float32).astype(jnp.bfloat16)
    bs = jnp.zeros((24, 1), jnp.float32)
    osm = np.asarray(jax.block_until_ready(
        matmul_rowbias(ws, xs, bs, activation="softmax", softmax_group=128,
                       out_dtype=jnp.float32)))
    logits = (np.asarray(ws, np.float32) @ np.asarray(xs, np.float32)).reshape(24, 2, 128)
    e = np.exp(logits - logits.max(-1, keepdims=True))
    refs = (e / e.sum(-1, keepdims=True)).reshape(24, 256)
    np.testing.assert_allclose(osm, refs, rtol=2e-2, atol=2e-2)

    # --- full network ---
    params = init_params(pkey)
    # The module has no flatten before fc1: Linear(2048,1500) acts on the last spatial dim,
    # so after eight 3x3 VALID convs that dim must equal 2048 -> input W = 2064.
    # Smallest consistent input: batch=1, 3 channels, H=17 (-> H'=1), W=2064 (-> W'=2048).
    x = jax.random.uniform(xkey, (1, NR_CHANNELS, 17, 2064), jnp.float32)

    fwd = jax.jit(vggnet_forward)
    out = jax.block_until_ready(fwd(params, x))

    assert out.shape == (1, 2048, 1, 1000), out.shape
    out_np = np.asarray(out)
    assert np.all(np.isfinite(out_np))
    # softmax over the channel axis (dim=1) sums to 1 (exact divide in the fused kernel)
    np.testing.assert_allclose(out_np.sum(axis=1), 1.0, rtol=1e-3, atol=1e-3)

    if RUN_FULL_REFERENCE:
        ref = jax.block_until_ready(jax.jit(reference_forward)(params, x))
        np.testing.assert_allclose(out_np, np.asarray(ref), rtol=5e-2, atol=1e-3)

    print("KERNEL_OK")
</pallas_src>

<mosaic_0001>
module attributes {stable_mosaic.version = 11 : i64} {
  func.func @_conv_img_kernel(%arg0: i32, %arg1: i32, %arg2: memref<1x6x48x8xbf16, #tpu.memory_space<vmem>>, %arg3: memref<3x3x8x16xbf16, #tpu.memory_space<vmem>>, %arg4: memref<1x16xf32, #tpu.memory_space<vmem>>, %arg5: memref<1x4x32x16xf32, #tpu.memory_space<vmem>>) attributes {dimension_semantics = [#tpu.dimension_semantics<parallel>, #tpu.dimension_semantics<parallel>], iteration_bounds = array<i64: 1, 1>, scalar_prefetch = 0 : i64, scratch_operands = 0 : i64, tpu.core_type = #tpu.core_type<tc>, window_params = [{transform_indices = @transform_0, window_bounds = array<i64: 1, 6, 48, 8>}, {transform_indices = @transform_1, window_bounds = array<i64: 3, 3, 8, 16>}, {transform_indices = @transform_2, window_bounds = array<i64: 1, 16>}, {transform_indices = @transform_3, window_bounds = array<i64: 1, 4, 32, 16>}]} {
    %c0 = arith.constant 0 : index
    %c0_0 = arith.constant 0 : index
    %0 = vector.load %arg4[%c0, %c0_0] : memref<1x16xf32, #tpu.memory_space<vmem>>, vector<1x16xf32>
    %c0_i32 = arith.constant 0 : i32
    %c4_i32 = arith.constant 4 : i32
    %1 = arith.addi %c0_i32, %c4_i32 : i32
    %c1_i32 = arith.constant 1 : i32
    scf.for %arg6 = %c0_i32 to %1 step %c1_i32  : i32 {
      %cst = arith.constant 0.000000e+00 : f32
      %2 = vector.broadcast %cst : f32 to vector<32x16xf32>
      %c0_i32_2 = arith.constant 0 : i32
      %3 = arith.addi %arg6, %c0_i32_2 : i32
      %c0_3 = arith.constant 0 : index
      %4 = arith.index_cast %3 : i32 to index
      %c0_4 = arith.constant 0 : index
      %c0_5 = arith.constant 0 : index
      %5 = vector.load %arg2[%c0_3, %4, %c0_4, %c0_5] : memref<1x6x48x8xbf16, #tpu.memory_space<vmem>>, vector<1x1x48x8xbf16>
      %6 = vector.shape_cast %5 : vector<1x1x48x8xbf16> to vector<48x8xbf16>
      %7 = vector.extract_strided_slice %6 {offsets = [0, 0], sizes = [32, 8], strides = [1, 1]} : vector<48x8xbf16> to vector<32x8xbf16>
      %c0_6 = arith.constant 0 : index
      %c0_7 = arith.constant 0 : index
      %c0_8 = arith.constant 0 : index
      %c0_9 = arith.constant 0 : index
      %8 = vector.load %arg3[%c0_6, %c0_7, %c0_8, %c0_9] : memref<3x3x8x16xbf16, #tpu.memory_space<vmem>>, vector<1x1x8x16xbf16>
      %9 = vector.shape_cast %8 : vector<1x1x8x16xbf16> to vector<8x16xbf16>
      %cst_10 = arith.constant dense<0.000000e+00> : vector<32x16xf32>
      %10 = tpu.matmul %7, %9, %cst_10 {dimension_numbers = #tpu.dot_dimension_numbers<[1], [0], [0], [1], [0, 0, 1, 1], [], []>} : vector<32x8xbf16>, vector<8x16xbf16>, vector<32x16xf32> -> vector<32x16xf32>
      %11 = arith.addf %2, %10 : vector<32x16xf32>
      %12 = vector.extract_strided_slice %6 {offsets = [1, 0], sizes = [32, 8], strides = [1, 1]} : vector<48x8xbf16> to vector<32x8xbf16>
      %c0_11 = arith.constant 0 : index
      %c1 = arith.constant 1 : index
      %c0_12 = arith.constant 0 : index
      %c0_13 = arith.constant 0 : index
      %13 = vector.load %arg3[%c0_11, %c1, %c0_12, %c0_13] : memref<3x3x8x16xbf16, #tpu.memory_space<vmem>>, vector<1x1x8x16xbf16>
      %14 = vector.shape_cast %13 : vector<1x1x8x16xbf16> to vector<8x16xbf16>
      %cst_14 = arith.constant dense<0.000000e+00> : vector<32x16xf32>
      %15 = tpu.matmul %12, %14, %cst_14 {dimension_numbers = #tpu.dot_dimension_numbers<[1], [0], [0], [1], [0, 0, 1, 1], [], []>} : vector<32x8xbf16>, vector<8x16xbf16>, vector<32x16xf32> -> vector<32x16xf32>
      %16 = arith.addf %11, %15 : vector<32x16xf32>
      %17 = vector.extract_strided_slice %6 {offsets = [2, 0], sizes = [32, 8], strides = [1, 1]} : vector<48x8xbf16> to vector<32x8xbf16>
      %c0_15 = arith.constant 0 : index
      %c2 = arith.constant 2 : index
      %c0_16 = arith.constant 0 : index
      %c0_17 = arith.constant 0 : index
      %18 = vector.load %arg3[%c0_15, %c2, %c0_16, %c0_17] : memref<3x3x8x16xbf16, #tpu.memory_space<vmem>>, vector<1x1x8x16xbf16>
      %19 = vector.shape_cast %18 : vector<1x1x8x16xbf16> to vector<8x16xbf16>
      %cst_18 = arith.constant dense<0.000000e+00> : vector<32x16xf32>
      %20 = tpu.matmul %17, %19, %cst_18 {dimension_numbers = #tpu.dot_dimension_numbers<[1], [0], [0], [1], [0, 0, 1, 1], [], []>} : vector<32x8xbf16>, vector<8x16xbf16>, vector<32x16xf32> -> vector<32x16xf32>
      %21 = arith.addf %16, %20 : vector<32x16xf32>
      %c1_i32_19 = arith.constant 1 : i32
      %22 = arith.addi %arg6, %c1_i32_19 : i32
      %c0_20 = arith.constant 0 : index
      %23 = arith.index_cast %22 : i32 to index
      %c0_21 = arith.constant 0 : index
      %c0_22 = arith.constant 0 : index
      %24 = vector.load %arg2[%c0_20, %23, %c0_21, %c0_22] : memref<1x6x48x8xbf16, #tpu.memory_space<vmem>>, vector<1x1x48x8xbf16>
      %25 = vector.shape_cast %24 : vector<1x1x48x8xbf16> to vector<48x8xbf16>
      %26 = vector.extract_strided_slice %25 {offsets = [0, 0], sizes = [32, 8], strides = [1, 1]} : vector<48x8xbf16> to vector<32x8xbf16>
      %c1_23 = arith.constant 1 : index
      %c0_24 = arith.constant 0 : index
      %c0_25 = arith.constant 0 : index
      %c0_26 = arith.constant 0 : index
      %27 = vector.load %arg3[%c1_23, %c0_24, %c0_25, %c0_26] : memref<3x3x8x16xbf16, #tpu.memory_space<vmem>>, vector<1x1x8x16xbf16>
      %28 = vector.shape_cast %27 : vector<1x1x8x16xbf16> to vector<8x16xbf16>
      %cst_27 = arith.constant dense<0.000000e+00> : vector<32x16xf32>
      %29 = tpu.matmul %26, %28, %cst_27 {dimension_numbers = #tpu.dot_dimension_numbers<[1], [0], [0], [1], [0, 0, 1, 1], [], []>} : vector<32x8xbf16>, vector<8x16xbf16>, vector<32x16xf32> -> vector<32x16xf32>
      %30 = arith.addf %21, %29 : vector<32x16xf32>
      %31 = vector.extract_strided_slice %25 {offsets = [1, 0], sizes = [32, 8], strides = [1, 1]} : vector<48x8xbf16> to vector<32x8xbf16>
      %c1_28 = arith.constant 1 : index
      %c1_29 = arith.constant 1 : index
      %c0_30 = arith.constant 0 : index
      %c0_31 = arith.constant 0 : index
      %32 = vector.load %arg3[%c1_28, %c1_29, %c0_30, %c0_31] : memref<3x3x8x16xbf16, #tpu.memory_space<vmem>>, vector<1x1x8x16xbf16>
      %33 = vector.shape_cast %32 : vector<1x1x8x16xbf16> to vector<8x16xbf16>
      %cst_32 = arith.constant dense<0.000000e+00> : vector<32x16xf32>
      %34 = tpu.matmul %31, %33, %cst_32 {dimension_numbers = #tpu.dot_dimension_numbers<[1], [0], [0], [1], [0, 0, 1, 1], [], []>} : vector<32x8xbf16>, vector<8x16xbf16>, vector<32x16xf32> -> vector<32x16xf32>
      %35 = arith.addf %30, %34 : vector<32x16xf32>
      %36 = vector.extract_strided_slice %25 {offsets = [2, 0], sizes = [32, 8], strides = [1, 1]} : vector<48x8xbf16> to vector<32x8xbf16>
      %c1_33 = arith.constant 1 : index
      %c2_34 = arith.constant 2 : index
      %c0_35 = arith.constant 0 : index
      %c0_36 = arith.constant 0 : index
      %37 = vector.load %arg3[%c1_33, %c2_34, %c0_35, %c0_36] : memref<3x3x8x16xbf16, #tpu.memory_space<vmem>>, vector<1x1x8x16xbf16>
      %38 = vector.shape_cast %37 : vector<1x1x8x16xbf16> to vector<8x16xbf16>
      %cst_37 = arith.constant dense<0.000000e+00> : vector<32x16xf32>
      %39 = tpu.matmul %36, %38, %cst_37 {dimension_numbers = #tpu.dot_dimension_numbers<[1], [0], [0], [1], [0, 0, 1, 1], [], []>} : vector<32x8xbf16>, vector<8x16xbf16>, vector<32x16xf32> -> vector<32x16xf32>
      %40 = arith.addf %35, %39 : vector<32x16xf32>
      %c2_i32 = arith.constant 2 : i32
      %41 = arith.addi %arg6, %c2_i32 : i32
      %c0_38 = arith.constant 0 : index
      %42 = arith.index_cast %41 : i32 to index
      %c0_39 = arith.constant 0 : index
      %c0_40 = arith.constant 0 : index
      %43 = vector.load %arg2[%c0_38, %42, %c0_39, %c0_40] : memref<1x6x48x8xbf16, #tpu.memory_space<vmem>>, vector<1x1x48x8xbf16>
      %44 = vector.shape_cast %43 : vector<1x1x48x8xbf16> to vector<48x8xbf16>
      %45 = vector.extract_strided_slice %44 {offsets = [0, 0], sizes = [32, 8], strides = [1, 1]} : vector<48x8xbf16> to vector<32x8xbf16>
      %c2_41 = arith.constant 2 : index
      %c0_42 = arith.constant 0 : index
      %c0_43 = arith.constant 0 : index
      %c0_44 = arith.constant 0 : index
      %46 = vector.load %arg3[%c2_41, %c0_42, %c0_43, %c0_44] : memref<3x3x8x16xbf16, #tpu.memory_space<vmem>>, vector<1x1x8x16xbf16>
      %47 = vector.shape_cast %46 : vector<1x1x8x16xbf16> to vector<8x16xbf16>
      %cst_45 = arith.constant dense<0.000000e+00> : vector<32x16xf32>
      %48 = tpu.matmul %45, %47, %cst_45 {dimension_numbers = #tpu.dot_dimension_numbers<[1], [0], [0], [1], [0, 0, 1, 1], [], []>} : vector<32x8xbf16>, vector<8x16xbf16>, vector<32x16xf32> -> vector<32x16xf32>
      %49 = arith.addf %40, %48 : vector<32x16xf32>
      %50 = vector.extract_strided_slice %44 {offsets = [1, 0], sizes = [32, 8], strides = [1, 1]} : vector<48x8xbf16> to vector<32x8xbf16>
      %c2_46 = arith.constant 2 : index
      %c1_47 = arith.constant 1 : index
      %c0_48 = arith.constant 0 : index
      %c0_49 = arith.constant 0 : index
      %51 = vector.load %arg3[%c2_46, %c1_47, %c0_48, %c0_49] : memref<3x3x8x16xbf16, #tpu.memory_space<vmem>>, vector<1x1x8x16xbf16>
      %52 = vector.shape_cast %51 : vector<1x1x8x16xbf16> to vector<8x16xbf16>
      %cst_50 = arith.constant dense<0.000000e+00> : vector<32x16xf32>
      %53 = tpu.matmul %50, %52, %cst_50 {dimension_numbers = #tpu.dot_dimension_numbers<[1], [0], [0], [1], [0, 0, 1, 1], [], []>} : vector<32x8xbf16>, vector<8x16xbf16>, vector<32x16xf32> -> vector<32x16xf32>
      %54 = arith.addf %49, %53 : vector<32x16xf32>
      %55 = vector.extract_strided_slice %44 {offsets = [2, 0], sizes = [32, 8], strides = [1, 1]} : vector<48x8xbf16> to vector<32x8xbf16>
      %c2_51 = arith.constant 2 : index
      %c2_52 = arith.constant 2 : index
      %c0_53 = arith.constant 0 : index
      %c0_54 = arith.constant 0 : index
      %56 = vector.load %arg3[%c2_51, %c2_52, %c0_53, %c0_54] : memref<3x3x8x16xbf16, #tpu.memory_space<vmem>>, vector<1x1x8x16xbf16>
      %57 = vector.shape_cast %56 : vector<1x1x8x16xbf16> to vector<8x16xbf16>
      %cst_55 = arith.constant dense<0.000000e+00> : vector<32x16xf32>
      %58 = tpu.matmul %55, %57, %cst_55 {dimension_numbers = #tpu.dot_dimension_numbers<[1], [0], [0], [1], [0, 0, 1, 1], [], []>} : vector<32x8xbf16>, vector<8x16xbf16>, vector<32x16xf32> -> vector<32x16xf32>
      %59 = arith.addf %54, %58 : vector<32x16xf32>
      %60 = vector.broadcast %0 : vector<1x16xf32> to vector<32x16xf32>
      %61 = arith.addf %59, %60 : vector<32x16xf32>
      %cst_56 = arith.constant 0.000000e+00 : f32
      %62 = vector.broadcast %cst_56 : f32 to vector<32x16xf32>
      %63 = arith.maximumf %61, %62 : vector<32x16xf32>
      %c0_57 = arith.constant 0 : index
      %64 = arith.index_cast %arg6 : i32 to index
      %c0_58 = arith.constant 0 : index
      %c0_59 = arith.constant 0 : index
      %65 = vector.load %arg5[%c0_57, %64, %c0_58, %c0_59] : memref<1x4x32x16xf32, #tpu.memory_space<vmem>>, vector<1x1x32x16xf32>
      %66 = vector.shape_cast %65 : vector<1x1x32x16xf32> to vector<32x16xf32>
      %67 = vector.shape_cast %63 : vector<32x16xf32> to vector<1x1x32x16xf32>
      tpu.vector_store %arg5[%c0_57, %64, %c0_58, %c0_59], %67 {strides = array<i32>} : memref<1x4x32x16xf32, #tpu.memory_space<vmem>>, vector<1x1x32x16xf32>,
    }
    %c4_i32_1 = arith.constant 4 : i32
    return
  }
  func.func @transform_0(%arg0: i32, %arg1: i32) -> (i32, i32, i32, i32) {
    %c0_i32 = arith.constant 0 : i32
    %c0_i32_0 = arith.constant 0 : i32
    %c0_i32_1 = arith.constant 0 : i32
    %c0_i32_2 = arith.constant 0 : i32
    return %arg0, %c0_i32, %c0_i32_0, %c0_i32_1 : i32, i32, i32, i32
  }
  func.func @transform_1(%arg0: i32, %arg1: i32) -> (i32, i32, i32, i32) {
    %c0_i32 = arith.constant 0 : i32
    %c0_i32_0 = arith.constant 0 : i32
    %c0_i32_1 = arith.constant 0 : i32
    %c0_i32_2 = arith.constant 0 : i32
    return %c0_i32, %c0_i32_0, %c0_i32_1, %arg1 : i32, i32, i32, i32
  }
  func.func @transform_2(%arg0: i32, %arg1: i32) -> (i32, i32) {
    %c0_i32 = arith.constant 0 : i32
    %c0_i32_0 = arith.constant 0 : i32
    return %c0_i32, %arg1 : i32, i32
  }
  func.func @transform_3(%arg0: i32, %arg1: i32) -> (i32, i32, i32, i32) {
    %c0_i32 = arith.constant 0 : i32
    %c0_i32_0 = arith.constant 0 : i32
    %c0_i32_1 = arith.constant 0 : i32
    return %arg0, %c0_i32, %c0_i32_0, %arg1 : i32, i32, i32, i32
  }
}

</mosaic_0001>

<llo_original>
// kernel: tpu_custom_call.1
$region0: #{tpu_custom_call.1}
  #allocation0 [shape = 'u32[]', space=smem, size = 0x4, offset = 0x4, fixed_abs, tag = 'smem constant byte address 0x4 - core index']
  #allocation1 [shape = 'u32[144,128]{1,0:T(1,128)}', space=vmem, size = 0x12000, scoped, tag = 'internal scratch']
  %s0 = inlined_call_operand.hbm [shape: bf16[1,6,48,8], index: 0, kind: input, shape index: {}]
  %s1 = inlined_call_operand.hbm [shape: bf16[3,3,8,16], index: 1, kind: input, shape index: {}]
  %s2 = inlined_call_operand.hbm [shape: f32[1,16], index: 2, kind: input, shape index: {}]
  %s3 = inlined_call_operand.hbm [shape: f32[1,4,32,16], index: 3, kind: output, shape index: {}]
  %s4 = sld [smem:[#allocation0]]
  $region41: #{tpu_custom_call.1} parent=0
    _
  %s6 = ssub.s32 1, %s4
  %s7 = scalar_select 0, %s6, %s4
  $region1: #{tpu_custom_call.1} parent=0
    #allocation2 [shape = 'u8[73728]{0}', space=vmem, size = 0x12000, scoped, tag = 'input window, operand 0, single buffered']
    #allocation3 [shape = 's32[1]{0}', space=sflag, size = 0x4, scoped, tag = 'scoped memory for tpu_custom_call.1']
    #allocation4 [shape = 's32[1]{0}', space=sflag, size = 0x4, scoped, tag = 'scoped memory for tpu_custom_call.1']
    #allocation5 [shape = 'u8[18432]{0}', space=vmem, size = 0x4800, scoped, tag = 'input window, operand 1, single buffered']
    #allocation6 [shape = 's32[1]{0}', space=sflag, size = 0x4, scoped, tag = 'scoped memory for tpu_custom_call.1']
    #allocation7 [shape = 'u8[512]{0}', space=vmem, size = 0x400, scoped, tag = 'input window, operand 2, single buffered']
    #allocation8 [shape = 'u8[65536]{0}', space=vmem, size = 0x10000, scoped, tag = 'output window, operand 0, single buffered']
    %8 = vsyncpa [#allocation3], 0
    %9 = vsyncpa [#allocation6], 0
    %10 = vsyncpa [#allocation4], 0
    // Predicated region
    $region2: #{tpu_custom_call.1} parent=1 // pred_check
      _
    $region3: #{tpu_custom_call.1} parent=1 // pred_check_branch
      %12 = sbr.rel (0) target = $region5
    $region4: #{tpu_custom_call.1} parent=1 // pred_region
      %s14 = ssub.s32 2304, 2304
      %15 = vsyncadd [#allocation3], %s14
      %s16 = sshll.u32 [#allocation2], 4
      %s17 = int_to_ptr.vmem [resolvable:$true] %s16
      %22 = dma.hbm_to_vmem [thread:$0]  %s0, 2304, %s17, [#allocation3], 64, 64, 4
    $region5: #{tpu_custom_call.1} parent=1 // pred_fallthru
      _
    // Predicated region
    $region6: #{tpu_custom_call.1} parent=1 // pred_check
      _
    $region7: #{tpu_custom_call.1} parent=1 // pred_check_branch
      %24 = sbr.rel (0) target = $region9
    $region8: #{tpu_custom_call.1} parent=1 // pred_region
      %s26 = ssub.s32 576, 576
      %27 = vsyncadd [#allocation6], %s26
      %s28 = sshll.u32 [#allocation5], 4
      %s29 = int_to_ptr.vmem [resolvable:$true] %s28
      %34 = dma.hbm_to_vmem [thread:$0]  %s1, 576, %s29, [#allocation6], 64, 64, 4
    $region9: #{tpu_custom_call.1} parent=1 // pred_fallthru
      _
    // Predicated region
    $region10: #{tpu_custom_call.1} parent=1 // pred_check
      _
    $region11: #{tpu_custom_call.1} parent=1 // pred_check_branch
      %36 = sbr.rel (0) target = $region13
    $region12: #{tpu_custom_call.1} parent=1 // pred_region
      %s38 = ssub.s32 16, 16
      %39 = vsyncadd [#allocation6], %s38
      %s41 = sshll.u32 [#allocation7], 4
      %s42 = int_to_ptr.vmem [resolvable:$true] %s41
      %44 = dma.hbm_to_vmem [thread:$0]  %s2, 16, %s42, [#allocation6]
    $region13: #{tpu_custom_call.1} parent=1 // pred_fallthru
      _
    // Predicated region
    $region14: #{tpu_custom_call.1} parent=1 // pred_check
      _
    $region15: #{tpu_custom_call.1} parent=1 // pred_check_branch
      %46 = sbr.rel (0) target = $region17
    $region16: #{tpu_custom_call.1} parent=1 // pred_region
      %47 = dma.done [#allocation3], 2304
    $region17: #{tpu_custom_call.1} parent=1 // pred_fallthru
      _
    // Predicated region
    $region18: #{tpu_custom_call.1} parent=1 // pred_check
      _
    $region19: #{tpu_custom_call.1} parent=1 // pred_check_branch
      %49 = sbr.rel (0) target = $region21
    $region20: #{tpu_custom_call.1} parent=1 // pred_region
      %50 = dma.done [#allocation6], 576
    $region21: #{tpu_custom_call.1} parent=1 // pred_fallthru
      _
    // Predicated region
    $region22: #{tpu_custom_call.1} parent=1 // pred_check
      _
    $region23: #{tpu_custom_call.1} parent=1 // pred_check_branch
      %52 = sbr.rel (0) target = $region25
    $region24: #{tpu_custom_call.1} parent=1 // pred_region
      %53 = dma.done [#allocation6], 16
    $region25: #{tpu_custom_call.1} parent=1 // pred_fallthru
      _
    %v55 = vld [vmem:[#allocation7] sm:$0x1]
    loop: start=0, step=1, limit=4
    $region26: #{tpu_custom_call.1} parent=1 // loop_pre_header
      _
    $region27: #{tpu_custom_call.1} parent=1 // loop_header
      %s57 = sphi 0, %s61
      %p58 = scmp.ge.s32.totalorder %s57, 4
    $region28: #{tpu_custom_call.1} parent=1 // loop_header_branch
      %60 = sbr.rel (%p58) target = $region32
    $region29: #{tpu_custom_call.1} parent=1 // loop_body
      %s62 = smul.u32 %s57, 6
      %s63 = smul.addr %s62, 4
      %s64 = scalar_lea.vmem [#allocation2], %s63
      %v65 = vld [vmem:[%s64] sm:$0xf]
      %v66 = vld [vmem:[%s64 + $0x4] sm:$0xf]
      %v67 = vld [vmem:[%s64 + $0x8] sm:$0xf]
      %v68 = vld [vmem:[%s64 + $0xc] sm:$0xf]
      %v69 = vld [vmem:[%s64 + $0x10] sm:$0xf]
      %v70 = vld [vmem:[#allocation5] sm:$0xf]
      %s71 = scalar_lea.vmem [#allocation5], 4
      %v72 = vld [vmem:[%s71] sm:$0xf]
      %v78 = vunpack.c.l.b16 %v65
      %v79 = vunpack.c.l.b16 %v66
      %v80 = vunpack.c.l.b16 %v67
      %v81 = vunpack.c.l.b16 %v68
      %v82 = vunpack.c.l.b16 %v69
      %v83 = vpack.c.b16 %v79, %v78
      %v84 = vpack.c.b16 %v81, %v80
      %v85 = vpack.c.b16 %v82, %v82
      %vm86 = vsmask.f32 7424
      %v88 = vshrl.u32 %v83, 16
      %v90 = vshll.u32 %v83, 16
      %v92 = vrot.slane %v90, 1
      %v93 = vor.u32 %v88, %v92
      %v95 = vshll.u32 %v84, 16
      %v97 = vrot.slane %v95, 1
      %v98 = vsel %vm86, %v93, %v97
      %v99 = vshrl.u32 %v84, 16
      %v101 = vor.u32 %v99, %v97
      %v103 = vshll.u32 %v85, 16
      %v105 = vrot.slane %v103, 1
      %v106 = vsel %vm86, %v101, %v105
      %vm107 = vcmask 64512
      %v109 = vsel %vm107, %v98, 0
      %v112 = vsel %vm107, %v106, 0
      %vm114 = vcmask 1043456
      %v116 = vsel %vm114, %v72, 0
      %118 = vmatprep.subr.bf16.mxu0 0
      %119 = vmatpush1.bf16.msra.mxu0 %v116
      %120 = vmatprep.subr.bf16.mxu0 0
      %121 = vmatpush1.bf16.msra.mxu0 0
      %122 = vmatprep.subr.bf16.mxu0 0
      %123 = vmatpush1.bf16.msra.mxu0 0
      %124 = vmatprep.subr.bf16.mxu0 0
      %125 = vmatpush1.bf16.msra.mxu0 0
      %126 = vmatprep.subr.bf16.mxu0 0
      %127 = vmatpush1.bf16.msra.mxu0 0
      %128 = vmatprep.subr.bf16.mxu0 0
      %129 = vmatpush1.bf16.msra.mxu0 0
      %130 = vmatprep.subr.bf16.mxu0 0
      %131 = vmatpush1.bf16.msra.mxu0 0
      %132 = vmatprep.subr.bf16.mxu0 0
      %133 = vmatpush1.bf16.msra.mxu0 0
      %134 = vmatprep.subr.bf16.mxu0 0
      %135 = vmatpush1.bf16.msra.mxu0 0
      %136 = vmatprep.subr.bf16.mxu0 0
      %137 = vmatpush1.bf16.msra.mxu0 0
      %138 = vmatprep.subr.bf16.mxu0 0
      %139 = vmatpush1.bf16.msra.mxu0 0
      %140 = vmatprep.subr.bf16.mxu0 0
      %141 = vmatpush1.bf16.msra.mxu0 0
      %142 = vmatprep.subr.bf16.mxu0 0
      %143 = vmatpush1.bf16.msra.mxu0 0
      %144 = vmatprep.subr.bf16.mxu0 0
      %145 = vmatpush1.bf16.msra.mxu0 0
      %146 = vmatprep.subr.bf16.mxu0 0
      %147 = vmatpush1.bf16.msra.mxu0 0
      %148 = vmatprep.subr.bf16.mxu0 0
      %149 = vmatpush1.bf16.msra.mxu0 0
      %150 = vmatprep.mubr.bf16.mxu0 0
      %151 = vmatmul.mubr.bf16.gmra.mrb[0].mxu0 %v109
      %v152 = vpop.f32.mrb[0].mxu0
      %v153 = vadd.f32 0.0, %v152
      %v154 = vpop.f32.mrb[0].mxu0
      %v155 = vpop.f32.mrb[0].mxu0
      %v156 = vadd.f32 0.0, %v155
      %v157 = vpop.f32.mrb[0].mxu0
      %158 = vmatprep.mubr.bf16.mxu0 0
      %159 = vmatmul.mubr.bf16.gmra.mrb[0].mxu0 %v112
      %v160 = vpop.f32.mrb[0].mxu0
      %v161 = vadd.f32 0.0, %v160
      %v162 = vpop.f32.mrb[0].mxu0
      %v163 = vpop.f32.mrb[0].mxu0
      %v164 = vadd.f32 0.0, %v163
      %v165 = vpop.f32.mrb[0].mxu0
      %166 = vdwg.mxu0
      %v167 = vsel %vm107, %v83, 0
      %v169 = vsel %vm107, %v84, 0
      %v172 = vsel %vm114, %v70, 0
      %174 = vmatprep.subr.bf16.mxu0 0
      %175 = vmatpush1.bf16.msra.mxu0 %v172
      %176 = vmatprep.subr.bf16.mxu0 0
      %177 = vmatpush1.bf16.msra.mxu0 0
      %178 = vmatprep.subr.bf16.mxu0 0
      %179 = vmatpush1.bf16.msra.mxu0 0
      %180 = vmatprep.subr.bf16.mxu0 0
      %181 = vmatpush1.bf16.msra.mxu0 0
      %182 = vmatprep.subr.bf16.mxu0 0
      %183 = vmatpush1.bf16.msra.mxu0 0
      %184 = vmatprep.subr.bf16.mxu0 0
      %185 = vmatpush1.bf16.msra.mxu0 0
      %186 = vmatprep.subr.bf16.mxu0 0
      %187 = vmatpush1.bf16.msra.mxu0 0
      %188 = vmatprep.subr.bf16.mxu0 0
      %189 = vmatpush1.bf16.msra.mxu0 0
      %190 = vmatprep.subr.bf16.mxu0 0
      %191 = vmatpush1.bf16.msra.mxu0 0
      %192 = vmatprep.subr.bf16.mxu0 0
      %193 = vmatpush1.bf16.msra.mxu0 0
      %194 = vmatprep.subr.bf16.mxu0 0
      %195 = vmatpush1.bf16.msra.mxu0 0
      %196 = vmatprep.subr.bf16.mxu0 0
      %197 = vmatpush1.bf16.msra.mxu0 0
      %198 = vmatprep.subr.bf16.mxu0 0
      %199 = vmatpush1.bf16.msra.mxu0 0
      %200 = vmatprep.subr.bf16.mxu0 0
      %201 = vmatpush1.bf16.msra.mxu0 0
      %202 = vmatprep.subr.bf16.mxu0 0
      %203 = vmatpush1.bf16.msra.mxu0 0
      %204 = vmatprep.subr.bf16.mxu0 0
      %205 = vmatpush1.bf16.msra.mxu0 0
      %206 = vmatprep.mubr.bf16.mxu0 0
      %207 = vmatmul.mubr.bf16.gmra.mrb[0].mxu0 %v167
      %v208 = vpop.f32.mrb[0].mxu0
      %v209 = vadd.f32 %v153, %v208
      %v210 = vpop.f32.mrb[0].mxu0
      %v211 = vpop.f32.mrb[0].mxu0
      %v212 = vadd.f32 %v156, %v211
      %v213 = vpop.f32.mrb[0].mxu0
      %214 = vmatprep.mubr.bf16.mxu0 0
      %215 = vmatmul.mubr.bf16.gmra.mrb[0].mxu0 %v169
      %v216 = vpop.f32.mrb[0].mxu0
      %v217 = vadd.f32 %v161, %v216
      %v218 = vpop.f32.mrb[0].mxu0
      %v219 = vpop.f32.mrb[0].mxu0
      %v220 = vadd.f32 %v164, %v219
      %v221 = vpop.f32.mrb[0].mxu0
      %222 = vdwg.mxu0
      %s223 = scalar_lea.vmem [#allocation5], 8
      %v224 = vld [vmem:[%s223] sm:$0xf]
      %vm225 = vcmask 1046528
      %v226 = vrot.slane %v83, 1
      %v227 = vrot.slane %v84, 1
      %v228 = vsel %vm225, %v226, %v227
      %v229 = vrot.slane %v85, 1
      %v230 = vsel %vm225, %v227, %v229
      %v232 = vsel %vm107, %v228, 0
      %v235 = vsel %vm107, %v230, 0
      %v238 = vsel %vm114, %v224, 0
      %240 = vmatprep.subr.bf16.mxu0 0
      %241 = vmatpush1.bf16.msra.mxu0 %v238
      %242 = vmatprep.subr.bf16.mxu0 0
      %243 = vmatpush1.bf16.msra.mxu0 0
      %244 = vmatprep.subr.bf16.mxu0 0
      %245 = vmatpush1.bf16.msra.mxu0 0
      %246 = vmatprep.subr.bf16.mxu0 0
      %247 = vmatpush1.bf16.msra.mxu0 0
      %248 = vmatprep.subr.bf16.mxu0 0
      %249 = vmatpush1.bf16.msra.mxu0 0
      %250 = vmatprep.subr.bf16.mxu0 0
      %251 = vmatpush1.bf16.msra.mxu0 0
      %252 = vmatprep.subr.bf16.mxu0 0
      %253 = vmatpush1.bf16.msra.mxu0 0
      %254 = vmatprep.subr.bf16.mxu0 0
      %255 = vmatpush1.bf16.msra.mxu0 0
      %256 = vmatprep.subr.bf16.mxu0 0
      %257 = vmatpush1.bf16.msra.mxu0 0
      %258 = vmatprep.subr.bf16.mxu0 0
      %259 = vmatpush1.bf16.msra.mxu0 0
      %260 = vmatprep.subr.bf16.mxu0 0
      %261 = vmatpush1.bf16.msra.mxu0 0
      %262 = vmatprep.subr.bf16.mxu0 0
      %263 = vmatpush1.bf16.msra.mxu0 0
      %264 = vmatprep.subr.bf16.mxu0 0
      %265 = vmatpush1.bf16.msra.mxu0 0
      %266 = vmatprep.subr.bf16.mxu0 0
      %267 = vmatpush1.bf16.msra.mxu0 0
      %268 = vmatprep.subr.bf16.mxu0 0
      %269 = vmatpush1.bf16.msra.mxu0 0
      %270 = vmatprep.subr.bf16.mxu0 0
      %271 = vmatpush1.bf16.msra.mxu0 0
      %272 = vmatprep.mubr.bf16.mxu0 0
      %273 = vmatmul.mubr.bf16.gmra.mrb[0].mxu0 %v232
      %v274 = vpop.f32.mrb[0].mxu0
      %v275 = vadd.f32 0.0, %v274
      %v276 = vpop.f32.mrb[0].mxu0
      %v277 = vpop.f32.mrb[0].mxu0
      %v278 = vadd.f32 0.0, %v277
      %v279 = vpop.f32.mrb[0].mxu0
      %280 = vmatprep.mubr.bf16.mxu0 0
      %281 = vmatmul.mubr.bf16.gmra.mrb[0].mxu0 %v235
      %v282 = vpop.f32.mrb[0].mxu0
      %v283 = vadd.f32 0.0, %v282
      %v284 = vpop.f32.mrb[0].mxu0
      %v285 = vpop.f32.mrb[0].mxu0
      %v286 = vadd.f32 0.0, %v285
      %v287 = vpop.f32.mrb[0].mxu0
      %288 = vdwg.mxu0
      %v289 = vadd.f32 %v209, %v275
      %v290 = vadd.f32 %v212, %v278
      %v291 = vadd.f32 %v217, %v283
      %v292 = vadd.f32 %v220, %v286
      %s293 = sadd.s32 %s57, 1
      %s294 = smul.u32 %s293, 6
      %s295 = smul.addr %s294, 4
      %s296 = scalar_lea.vmem [#allocation2], %s295
      %v297 = vld [vmem:[%s296] sm:$0xf]
      %v298 = vld [vmem:[%s296 + $0x4] sm:$0xf]
      %v299 = vld [vmem:[%s296 + $0x8] sm:$0xf]
      %v300 = vld [vmem:[%s296 + $0xc] sm:$0xf]
      %v301 = vld [vmem:[%s296 + $0x10] sm:$0xf]
      %s302 = scalar_lea.vmem [#allocation5], 12
      %v303 = vld [vmem:[%s302] sm:$0xf]
      %v308 = vunpack.c.l.b16 %v297
      %v309 = vunpack.c.l.b16 %v298
      %v310 = vunpack.c.l.b16 %v299
      %v311 = vunpack.c.l.b16 %v300
      %v312 = vpack.c.b16 %v309, %v308
      %v313 = vpack.c.b16 %v311, %v310
      %v315 = vsel %vm107, %v312, 0
      %v318 = vsel %vm107, %v313, 0
      %v321 = vsel %vm114, %v303, 0
      %323 = vmatprep.subr.bf16.mxu0 0
      %324 = vmatpush1.bf16.msra.mxu0 %v321
      %325 = vmatprep.subr.bf16.mxu0 0
      %326 = vmatpush1.bf16.msra.mxu0 0
      %327 = vmatprep.subr.bf16.mxu0 0
      %328 = vmatpush1.bf16.msra.mxu0 0
      %329 = vmatprep.subr.bf16.mxu0 0
      %330 = vmatpush1.bf16.msra.mxu0 0
      %331 = vmatprep.subr.bf16.mxu0 0
      %332 = vmatpush1.bf16.msra.mxu0 0
      %333 = vmatprep.subr.bf16.mxu0 0
      %334 = vmatpush1.bf16.msra.mxu0 0
      %335 = vmatprep.subr.bf16.mxu0 0
      %336 = vmatpush1.bf16.msra.mxu0 0
      %337 = vmatprep.subr.bf16.mxu0 0
      %338 = vmatpush1.bf16.msra.mxu0 0
      %339 = vmatprep.subr.bf16.mxu0 0
      %340 = vmatpush1.bf16.msra.mxu0 0
      %341 = vmatprep.subr.bf16.mxu0 0
      %342 = vmatpush1.bf16.msra.mxu0 0
      %343 = vmatprep.subr.bf16.mxu0 0
      %344 = vmatpush1.bf16.msra.mxu0 0
      %345 = vmatprep.subr.bf16.mxu0 0
      %346 = vmatpush1.bf16.msra.mxu0 0
      %347 = vmatprep.subr.bf16.mxu0 0
      %348 = vmatpush1.bf16.msra.mxu0 0
      %349 = vmatprep.subr.bf16.mxu0 0
      %350 = vmatpush1.bf16.msra.mxu0 0
      %351 = vmatprep.subr.bf16.mxu0 0
      %352 = vmatpush1.bf16.msra.mxu0 0
      %353 = vmatprep.subr.bf16.mxu0 0
      %354 = vmatpush1.bf16.msra.mxu0 0
      %355 = vmatprep.mubr.bf16.mxu0 0
      %356 = vmatmul.mubr.bf16.gmra.mrb[0].mxu0 %v315
      %v357 = vpop.f32.mrb[0].mxu0
      %v358 = vadd.f32 0.0, %v357
      %v359 = vpop.f32.mrb[0].mxu0
      %v360 = vpop.f32.mrb[0].mxu0
      %v361 = vadd.f32 0.0, %v360
      %v362 = vpop.f32.mrb[0].mxu0
      %363 = vmatprep.mubr.bf16.mxu0 0
      %364 = vmatmul.mubr.bf16.gmra.mrb[0].mxu0 %v318
      %v365 = vpop.f32.mrb[0].mxu0
      %v366 = vadd.f32 0.0, %v365
      %v367 = vpop.f32.mrb[0].mxu0
      %v368 = vpop.f32.mrb[0].mxu0
      %v369 = vadd.f32 0.0, %v368
      %v370 = vpop.f32.mrb[0].mxu0
      %371 = vdwg.mxu0
      %v372 = vadd.f32 %v289, %v358
      %v373 = vadd.f32 %v290, %v361
      %v374 = vadd.f32 %v291, %v366
      %v375 = vadd.f32 %v292, %v369
      %s376 = scalar_lea.vmem [#allocation5], 16
      %v377 = vld [vmem:[%s376] sm:$0xf]
      %v379 = vunpack.c.l.b16 %v301
      %v380 = vpack.c.b16 %v379, %v379
      %v381 = vshrl.u32 %v312, 16
      %v383 = vshll.u32 %v312, 16
      %v385 = vrot.slane %v383, 1
      %v386 = vor.u32 %v381, %v385
      %v387 = vshll.u32 %v313, 16
      %v389 = vrot.slane %v387, 1
      %v390 = vsel %vm86, %v386, %v389
      %v391 = vshrl.u32 %v313, 16
      %v393 = vor.u32 %v391, %v389
      %v395 = vshll.u32 %v380, 16
      %v397 = vrot.slane %v395, 1
      %v398 = vsel %vm86, %v393, %v397
      %v400 = vsel %vm107, %v390, 0
      %v403 = vsel %vm107, %v398, 0
      %v406 = vsel %vm114, %v377, 0
      %408 = vmatprep.subr.bf16.mxu0 0
      %409 = vmatpush1.bf16.msra.mxu0 %v406
      %410 = vmatprep.subr.bf16.mxu0 0
      %411 = vmatpush1.bf16.msra.mxu0 0
      %412 = vmatprep.subr.bf16.mxu0 0
      %413 = vmatpush1.bf16.msra.mxu0 0
      %414 = vmatprep.subr.bf16.mxu0 0
      %415 = vmatpush1.bf16.msra.mxu0 0
      %416 = vmatprep.subr.bf16.mxu0 0
      %417 = vmatpush1.bf16.msra.mxu0 0
      %418 = vmatprep.subr.bf16.mxu0 0
      %419 = vmatpush1.bf16.msra.mxu0 0
      %420 = vmatprep.subr.bf16.mxu0 0
      %421 = vmatpush1.bf16.msra.mxu0 0
      %422 = vmatprep.subr.bf16.mxu0 0
      %423 = vmatpush1.bf16.msra.mxu0 0
      %424 = vmatprep.subr.bf16.mxu0 0
      %425 = vmatpush1.bf16.msra.mxu0 0
      %426 = vmatprep.subr.bf16.mxu0 0
      %427 = vmatpush1.bf16.msra.mxu0 0
      %428 = vmatprep.subr.bf16.mxu0 0
      %429 = vmatpush1.bf16.msra.mxu0 0
      %430 = vmatprep.subr.bf16.mxu0 0
      %431 = vmatpush1.bf16.msra.mxu0 0
      %432 = vmatprep.subr.bf16.mxu0 0
      %433 = vmatpush1.bf16.msra.mxu0 0
      %434 = vmatprep.subr.bf16.mxu0 0
      %435 = vmatpush1.bf16.msra.mxu0 0
      %436 = vmatprep.subr.bf16.mxu0 0
      %437 = vmatpush1.bf16.msra.mxu0 0
      %438 = vmatprep.subr.bf16.mxu0 0
      %439 = vmatpush1.bf16.msra.mxu0 0
      %440 = vmatprep.mubr.bf16.mxu0 0
      %441 = vmatmul.mubr.bf16.gmra.mrb[0].mxu0 %v400
      %v442 = vpop.f32.mrb[0].mxu0
      %v443 = vadd.f32 0.0, %v442
      %v444 = vpop.f32.mrb[0].mxu0
      %v445 = vpop.f32.mrb[0].mxu0
      %v446 = vadd.f32 0.0, %v445
      %v447 = vpop.f32.mrb[0].mxu0
      %448 = vmatprep.mubr.bf16.mxu0 0
      %449 = vmatmul.mubr.bf16.gmra.mrb[0].mxu0 %v403
      %v450 = vpop.f32.mrb[0].mxu0
      %v451 = vadd.f32 0.0, %v450
      %v452 = vpop.f32.mrb[0].mxu0
      %v453 = vpop.f32.mrb[0].mxu0
      %v454 = vadd.f32 0.0, %v453
      %v455 = vpop.f32.mrb[0].mxu0
      %456 = vdwg.mxu0
      %v457 = vadd.f32 %v372, %v443
      %v458 = vadd.f32 %v373, %v446
      %v459 = vadd.f32 %v374, %v451
      %v460 = vadd.f32 %v375, %v454
      %s461 = scalar_lea.vmem [#allocation5], 20
      %v462 = vld [vmem:[%s461] sm:$0xf]
      %v463 = vrot.slane %v312, 1
      %v464 = vrot.slane %v313, 1
      %v465 = vsel %vm225, %v463, %v464
      %v466 = vrot.slane %v380, 1
      %v467 = vsel %vm225, %v464, %v466
      %v469 = vsel %vm107, %v465, 0
      %v472 = vsel %vm107, %v467, 0
      %v475 = vsel %vm114, %v462, 0
      %477 = vmatprep.subr.bf16.mxu0 0
      %478 = vmatpush1.bf16.msra.mxu0 %v475
      %479 = vmatprep.subr.bf16.mxu0 0
      %480 = vmatpush1.bf16.msra.mxu0 0
      %481 = vmatprep.subr.bf16.mxu0 0
      %482 = vmatpush1.bf16.msra.mxu0 0
      %483 = vmatprep.subr.bf16.mxu0 0
      %484 = vmatpush1.bf16.msra.mxu0 0
      %485 = vmatprep.subr.bf16.mxu0 0
      %486 = vmatpush1.bf16.msra.mxu0 0
      %487 = vmatprep.subr.bf16.mxu0 0
      %488 = vmatpush1.bf16.msra.mxu0 0
      %489 = vmatprep.subr.bf16.mxu0 0
      %490 = vmatpush1.bf16.msra.mxu0 0
      %491 = vmatprep.subr.bf16.mxu0 0
      %492 = vmatpush1.bf16.msra.mxu0 0
      %493 = vmatprep.subr.bf16.mxu0 0
      %494 = vmatpush1.bf16.msra.mxu0 0
      %495 = vmatprep.subr.bf16.mxu0 0
      %496 = vmatpush1.bf16.msra.mxu0 0
      %497 = vmatprep.subr.bf16.mxu0 0
      %498 = vmatpush1.bf16.msra.mxu0 0
      %499 = vmatprep.subr.bf16.mxu0 0
      %500 = vmatpush1.bf16.msra.mxu0 0
      %501 = vmatprep.subr.bf16.mxu0 0
      %502 = vmatpush1.bf16.msra.mxu0 0
      %503 = vmatprep.subr.bf16.mxu0 0
      %504 = vmatpush1.bf16.msra.mxu0 0
      %505 = vmatprep.subr.bf16.mxu0 0
      %506 = vmatpush1.bf16.msra.mxu0 0
      %507 = vmatprep.subr.bf16.mxu0 0
      %508 = vmatpush1.bf16.msra.mxu0 0
      %509 = vmatprep.mubr.bf16.mxu0 0
      %510 = vmatmul.mubr.bf16.gmra.mrb[0].mxu0 %v469
      %v511 = vpop.f32.mrb[0].mxu0
      %v512 = vadd.f32 0.0, %v511
      %v513 = vpop.f32.mrb[0].mxu0
      %v514 = vpop.f32.mrb[0].mxu0
      %v515 = vadd.f32 0.0, %v514
      %v516 = vpop.f32.mrb[0].mxu0
      %517 = vmatprep.mubr.bf16.mxu0 0
      %518 = vmatmul.mubr.bf16.gmra.mrb[0].mxu0 %v472
      %v519 = vpop.f32.mrb[0].mxu0
      %v520 = vadd.f32 0.0, %v519
      %v521 = vpop.f32.mrb[0].mxu0
      %v522 = vpop.f32.mrb[0].mxu0
      %v523 = vadd.f32 0.0, %v522
      %v524 = vpop.f32.mrb[0].mxu0
      %525 = vdwg.mxu0
      %v526 = vadd.f32 %v457, %v512
      %v527 = vadd.f32 %v458, %v515
      %v528 = vadd.f32 %v459, %v520
      %v529 = vadd.f32 %v460, %v523
      %s530 = sadd.s32 %s57, 2
      %s531 = smul.u32 %s530, 6
      %s532 = smul.addr %s531, 4
      %s533 = scalar_lea.vmem [#allocation2], %s532
      %v534 = vld [vmem:[%s533] sm:$0xf]
      %v535 = vld [vmem:[%s533 + $0x4] sm:$0xf]
      %v536 = vld [vmem:[%s533 + $0x8] sm:$0xf]
      %v537 = vld [vmem:[%s533 + $0xc] sm:$0xf]
      %v538 = vld [vmem:[%s533 + $0x10] sm:$0xf]
      %s539 = scalar_lea.vmem [#allocation5], 24
      %v540 = vld [vmem:[%s539] sm:$0xf]
      %v545 = vunpack.c.l.b16 %v534
      %v546 = vunpack.c.l.b16 %v535
      %v547 = vunpack.c.l.b16 %v536
      %v548 = vunpack.c.l.b16 %v537
      %v549 = vpack.c.b16 %v546, %v545
      %v550 = vpack.c.b16 %v548, %v547
      %v552 = vsel %vm107, %v549, 0
      %v555 = vsel %vm107, %v550, 0
      %v558 = vsel %vm114, %v540, 0
      %560 = vmatprep.subr.bf16.mxu0 0
      %561 = vmatpush1.bf16.msra.mxu0 %v558
      %562 = vmatprep.subr.bf16.mxu0 0
      %563 = vmatpush1.bf16.msra.mxu0 0
      %564 = vmatprep.subr.bf16.mxu0 0
      %565 = vmatpush1.bf16.msra.mxu0 0
      %566 = vmatprep.subr.bf16.mxu0 0
      %567 = vmatpush1.bf16.msra.mxu0 0
      %568 = vmatprep.subr.bf16.mxu0 0
      %569 = vmatpush1.bf16.msra.mxu0 0
      %570 = vmatprep.subr.bf16.mxu0 0
      %571 = vmatpush1.bf16.msra.mxu0 0
      %572 = vmatprep.subr.bf16.mxu0 0
      %573 = vmatpush1.bf16.msra.mxu0 0
      %574 = vmatprep.subr.bf16.mxu0 0
      %575 = vmatpush1.bf16.msra.mxu0 0
      %576 = vmatprep.subr.bf16.mxu0 0
      %577 = vmatpush1.bf16.msra.mxu0 0
      %578 = vmatprep.subr.bf16.mxu0 0
      %579 = vmatpush1.bf16.msra.mxu0 0
      %580 = vmatprep.subr.bf16.mxu0 0
      %581 = vmatpush1.bf16.msra.mxu0 0
      %582 = vmatprep.subr.bf16.mxu0 0
      %583 = vmatpush1.bf16.msra.mxu0 0
      %584 = vmatprep.subr.bf16.mxu0 0
      %585 = vmatpush1.bf16.msra.mxu0 0
      %586 = vmatprep.subr.bf16.mxu0 0
      %587 = vmatpush1.bf16.msra.mxu0 0
      %588 = vmatprep.subr.bf16.mxu0 0
      %589 = vmatpush1.bf16.msra.mxu0 0
      %590 = vmatprep.subr.bf16.mxu0 0
      %591 = vmatpush1.bf16.msra.mxu0 0
      %592 = vmatprep.mubr.bf16.mxu0 0
      %593 = vmatmul.mubr.bf16.gmra.mrb[0].mxu0 %v552
      %v594 = vpop.f32.mrb[0].mxu0
      %v595 = vadd.f32 0.0, %v594
      %v596 = vpop.f32.mrb[0].mxu0
      %v597 = vpop.f32.mrb[0].mxu0
      %v598 = vadd.f32 0.0, %v597
      %v599 = vpop.f32.mrb[0].mxu0
      %600 = vmatprep.mubr.bf16.mxu0 0
      %601 = vmatmul.mubr.bf16.gmra.mrb[0].mxu0 %v555
      %v602 = vpop.f32.mrb[0].mxu0
      %v603 = vadd.f32 0.0, %v602
      %v604 = vpop.f32.mrb[0].mxu0
      %v605 = vpop.f32.mrb[0].mxu0
      %v606 = vadd.f32 0.0, %v605
      %v607 = vpop.f32.mrb[0].mxu0
      %608 = vdwg.mxu0
      %v609 = vadd.f32 %v526, %v595
      %v610 = vadd.f32 %v527, %v598
      %v611 = vadd.f32 %v528, %v603
      %v612 = vadd.f32 %v529, %v606
      %s613 = scalar_lea.vmem [#allocation5], 28
      %v614 = vld [vmem:[%s613] sm:$0xf]
      %v616 = vunpack.c.l.b16 %v538
      %v617 = vpack.c.b16 %v616, %v616
      %v618 = vshrl.u32 %v549, 16
      %v620 = vshll.u32 %v549, 16
      %v622 = vrot.slane %v620, 1
      %v623 = vor.u32 %v618, %v622
      %v624 = vshll.u32 %v550, 16
      %v626 = vrot.slane %v624, 1
      %v627 = vsel %vm86, %v623, %v626
      %v628 = vshrl.u32 %v550, 16
      %v630 = vor.u32 %v628, %v626
      %v632 = vshll.u32 %v617, 16
      %v634 = vrot.slane %v632, 1
      %v635 = vsel %vm86, %v630, %v634
      %v637 = vsel %vm107, %v627, 0
      %v640 = vsel %vm107, %v635, 0
      %v643 = vsel %vm114, %v614, 0
      %645 = vmatprep.subr.bf16.mxu0 0
      %646 = vmatpush1.bf16.msra.mxu0 %v643
      %647 = vmatprep.subr.bf16.mxu0 0
      %648 = vmatpush1.bf16.msra.mxu0 0
      %649 = vmatprep.subr.bf16.mxu0 0
      %650 = vmatpush1.bf16.msra.mxu0 0
      %651 = vmatprep.subr.bf16.mxu0 0
      %652 = vmatpush1.bf16.msra.mxu0 0
      %653 = vmatprep.subr.bf16.mxu0 0
      %654 = vmatpush1.bf16.msra.mxu0 0
      %655 = vmatprep.subr.bf16.mxu0 0
      %656 = vmatpush1.bf16.msra.mxu0 0
      %657 = vmatprep.subr.bf16.mxu0 0
      %658 = vmatpush1.bf16.msra.mxu0 0
      %659 = vmatprep.subr.bf16.mxu0 0
      %660 = vmatpush1.bf16.msra.mxu0 0
      %661 = vmatprep.subr.bf16.mxu0 0
      %662 = vmatpush1.bf16.msra.mxu0 0
      %663 = vmatprep.subr.bf16.mxu0 0
      %664 = vmatpush1.bf16.msra.mxu0 0
      %665 = vmatprep.subr.bf16.mxu0 0
      %666 = vmatpush1.bf16.msra.mxu0 0
      %667 = vmatprep.subr.bf16.mxu0 0
      %668 = vmatpush1.bf16.msra.mxu0 0
      %669 = vmatprep.subr.bf16.mxu0 0
      %670 = vmatpush1.bf16.msra.mxu0 0
      %671 = vmatprep.subr.bf16.mxu0 0
      %672 = vmatpush1.bf16.msra.mxu0 0
      %673 = vmatprep.subr.bf16.mxu0 0
      %674 = vmatpush1.bf16.msra.mxu0 0
      %675 = vmatprep.subr.bf16.mxu0 0
      %676 = vmatpush1.bf16.msra.mxu0 0
      %677 = vmatprep.mubr.bf16.mxu0 0
      %678 = vmatmul.mubr.bf16.gmra.mrb[0].mxu0 %v637
      %v679 = vpop.f32.mrb[0].mxu0
      %v680 = vadd.f32 0.0, %v679
      %v681 = vpop.f32.mrb[0].mxu0
      %v682 = vpop.f32.mrb[0].mxu0
      %v683 = vadd.f32 0.0, %v682
      %v684 = vpop.f32.mrb[0].mxu0
      %685 = vmatprep.mubr.bf16.mxu0 0
      %686 = vmatmul.mubr.bf16.gmra.mrb[0].mxu0 %v640
      %v687 = vpop.f32.mrb[0].mxu0
      %v688 = vadd.f32 0.0, %v687
      %v689 = vpop.f32.mrb[0].mxu0
      %v690 = vpop.f32.mrb[0].mxu0
      %v691 = vadd.f32 0.0, %v690
      %v692 = vpop.f32.mrb[0].mxu0
      %693 = vdwg.mxu0
      %v694 = vadd.f32 %v609, %v680
      %v695 = vadd.f32 %v610, %v683
      %v696 = vadd.f32 %v611, %v688
      %v697 = vadd.f32 %v612, %v691
      %s698 = scalar_lea.vmem [#allocation5], 32
      %v699 = vld [vmem:[%s698] sm:$0xf]
      %v700 = vrot.slane %v549, 1
      %v701 = vrot.slane %v550, 1
      %v702 = vsel %vm225, %v700, %v701
      %v703 = vrot.slane %v617, 1
      %v704 = vsel %vm225, %v701, %v703
      %v706 = vsel %vm107, %v702, 0
      %v709 = vsel %vm107, %v704, 0
      %v712 = vsel %vm114, %v699, 0
      %714 = vmatprep.subr.bf16.mxu0 0
      %715 = vmatpush1.bf16.msra.mxu0 %v712
      %716 = vmatprep.subr.bf16.mxu0 0
      %717 = vmatpush1.bf16.msra.mxu0 0
      %718 = vmatprep.subr.bf16.mxu0 0
      %719 = vmatpush1.bf16.msra.mxu0 0
      %720 = vmatprep.subr.bf16.mxu0 0
      %721 = vmatpush1.bf16.msra.mxu0 0
      %722 = vmatprep.subr.bf16.mxu0 0
      %723 = vmatpush1.bf16.msra.mxu0 0
      %724 = vmatprep.subr.bf16.mxu0 0
      %725 = vmatpush1.bf16.msra.mxu0 0
      %726 = vmatprep.subr.bf16.mxu0 0
      %727 = vmatpush1.bf16.msra.mxu0 0
      %728 = vmatprep.subr.bf16.mxu0 0
      %729 = vmatpush1.bf16.msra.mxu0 0
      %730 = vmatprep.subr.bf16.mxu0 0
      %731 = vmatpush1.bf16.msra.mxu0 0
      %732 = vmatprep.subr.bf16.mxu0 0
      %733 = vmatpush1.bf16.msra.mxu0 0
      %734 = vmatprep.subr.bf16.mxu0 0
      %735 = vmatpush1.bf16.msra.mxu0 0
      %736 = vmatprep.subr.bf16.mxu0 0
      %737 = vmatpush1.bf16.msra.mxu0 0
      %738 = vmatprep.subr.bf16.mxu0 0
      %739 = vmatpush1.bf16.msra.mxu0 0
      %740 = vmatprep.subr.bf16.mxu0 0
      %741 = vmatpush1.bf16.msra.mxu0 0
      %742 = vmatprep.subr.bf16.mxu0 0
      %743 = vmatpush1.bf16.msra.mxu0 0
      %744 = vmatprep.subr.bf16.mxu0 0
      %745 = vmatpush1.bf16.msra.mxu0 0
      %746 = vmatprep.mubr.bf16.mxu0 0
      %747 = vmatmul.mubr.bf16.gmra.mrb[0].mxu0 %v706
      %v748 = vpop.f32.mrb[0].mxu0
      %v749 = vadd.f32 0.0, %v748
      %v750 = vpop.f32.mrb[0].mxu0
      %v751 = vpop.f32.mrb[0].mxu0
      %v752 = vadd.f32 0.0, %v751
      %v753 = vpop.f32.mrb[0].mxu0
      %754 = vmatprep.mubr.bf16.mxu0 0
      %755 = vmatmul.mubr.bf16.gmra.mrb[0].mxu0 %v709
      %v756 = vpop.f32.mrb[0].mxu0
      %v757 = vadd.f32 0.0, %v756
      %v758 = vpop.f32.mrb[0].mxu0
      %v759 = vpop.f32.mrb[0].mxu0
      %v760 = vadd.f32 0.0, %v759
      %v761 = vpop.f32.mrb[0].mxu0
      %762 = vdwg.mxu0
      %v763 = vadd.f32 %v694, %v749
      %v764 = vadd.f32 %v695, %v752
      %v765 = vadd.f32 %v696, %v757
      %v766 = vadd.f32 %v697, %v760
      %v768 = vlaneseq
      %v769 = vshrl.u32 %v768, 7
      %v770 = vsub.s32 0, %v769
      %v771 = vrot.slane %v55, %v770
      %v773 = vadd.f32 %v763, %v771
      %v774 = vadd.f32 %v764, %v771
      %v775 = vadd.f32 %v765, %v771
      %v776 = vadd.f32 %v766, %v771
      %v777 = vmax.f32 %v773, 0.0
      %v778 = vmax.f32 %v774, 0.0
      %v779 = vmax.f32 %v775, 0.0
      %v780 = vmax.f32 %v776, 0.0
      %s781 = smul.u32 %s57, 32
      %s782 = scalar_lea.vmem [#allocation8], %s781
      %vm783 = vcmask 130048
      %784 = vst.msk [vmem:[%s782] sm:$0xff] %vm783, %v777
      %785 = vst.msk [vmem:[%s782 + $0x8] sm:$0xff] %vm783, %v778
      %786 = vst.msk [vmem:[%s782 + $0x10] sm:$0xff] %vm783, %v779
      %787 = vst.msk [vmem:[%s782 + $0x18] sm:$0xff] %vm783, %v780
    $region30: #{tpu_custom_call.1} parent=1 // loop_footer
      %s61 = sadd.s32 1, %s57
    $region31: #{tpu_custom_call.1} parent=1 // loop_footer_branch
      %56 = sbr.rel target = $region27
    $region32: #{tpu_custom_call.1} parent=1 // loop_exit
      _
    // Predicated region
    $region33: #{tpu_custom_call.1} parent=1 // pred_check
      _
    $region34: #{tpu_custom_call.1} parent=1 // pred_check_branch
      %789 = sbr.rel (0) target = $region36
    $region35: #{tpu_custom_call.1} parent=1 // pred_region
      %s791 = ssub.s32 2048, 2048
      %792 = vsyncadd [#allocation4], %s791
      %s793 = sshll.u32 [#allocation8], 4
      %s794 = int_to_ptr.vmem [resolvable:$true] %s793
      %799 = dma.vmem_to_hbm [thread:$0]  %s794, 2048, %s3, [#allocation4], 128, 128, 8
    $region36: #{tpu_custom_call.1} parent=1 // pred_fallthru
      _
    // Predicated region
    $region37: #{tpu_custom_call.1} parent=1 // pred_check
      _
    $region38: #{tpu_custom_call.1} parent=1 // pred_check_branch
      %801 = sbr.rel (0) target = $region40
    $region39: #{tpu_custom_call.1} parent=1 // pred_region
      %802 = dma.done [#allocation4], 2048
    $region40: #{tpu_custom_call.1} parent=1 // pred_fallthru
      _
    %803 = vsyncpa [#allocation3], 1
    %804 = vsyncpa [#allocation6], 1
    %805 = vsyncpa [#allocation4], 1

</llo_original>
